<compile_context>
chip_gen: v7x
topology: tpu7x:2x2x1
jax: 0.10.0
libtpu: 0.0.40
codegen_flags: <defaults>
</compile_context>

<pallas_src>
import functools
import math

import jax
import jax.numpy as jnp
from jax.experimental import pallas as pl
from jax.experimental.pallas import tpu as pltpu


def _round_up(x, m):
    return (x + m - 1) // m * m


def _lstm_gate_math(gates, c_prev, Hp):
    """PyTorch LSTMCell gate math on padded-width gate pre-activations.

    gates : [B, 4*Hp] f32, gate order (i, f, g, o), each block Hp lanes wide.
    c_prev: [B, Hp]   f32 previous cell state.
    """
    # sigmoid over the contiguous (i|f) half, tanh over g, sigmoid over o:
    # exactly 4*Hp lanes of transcendentals, all slices 128-lane aligned.
    if_sig = jax.nn.sigmoid(gates[:, :2 * Hp])
    i_g = if_sig[:, :Hp]
    f_g = if_sig[:, Hp:]
    g_g = jnp.tanh(gates[:, 2 * Hp:3 * Hp])
    o_g = jax.nn.sigmoid(gates[:, 3 * Hp:])
    c_new = f_g * c_prev + i_g * g_g
    h_new = o_g * jnp.tanh(c_new)
    return h_new, c_new


def _fused_lstm_kernel(x_ref, h0_ref, c0_ref, w_ref, b_ref, h_out_ref, c_out_ref,
                       xh_ref, *, num_layers, Imax, Hp):
    """Whole stack in one grid step (small-weight regime; no per-layer pipeline overhead).

    x_ref  : [B, Imax]          layer-0 input (feature-padded)
    h0_ref : [L, B, Hp]         initial hidden states
    c0_ref : [L, B, Hp]         initial cell states
    w_ref  : [L, Imax+Hp, 4Hp]  bf16 stacked [W_ih^T ; W_hh^T] (zero-padded rows / cols)
    b_ref  : [L, 1, 4Hp]        f32 (b_ih + b_hh), gate-padded
    h_out_ref, c_out_ref : [L, B, Hp]
    xh_ref : [B, Imax+Hp]       f32 scratch holding the fused [input | h] MXU operand
    """
    xh_ref[:, :Imax] = x_ref[...].astype(jnp.float32)
    for l in range(num_layers):              # static unroll; L is small in this regime
        xh_ref[:, Imax:] = h0_ref[l].astype(jnp.float32)
        a = xh_ref[...].astype(w_ref.dtype)  # bf16 MXU operand (weights already bf16)
        # Single fused matmul == x @ W_ih^T + h @ W_hh^T, f32 accumulation.
        gates = (jnp.dot(a, w_ref[l], preferred_element_type=jnp.float32)
                 + b_ref[l].astype(jnp.float32))
        h_new, c_new = _lstm_gate_math(gates, c0_ref[l].astype(jnp.float32), Hp)
        h_out_ref[l] = h_new.astype(h_out_ref.dtype)
        c_out_ref[l] = c_new.astype(c_out_ref.dtype)
        # Next layer's input.  Rows [H, Imax) of every layer>0 weight matrix are zero, so
        # the stale tail of xh (when Imax > Hp) needs no re-zeroing.
        # TODO(synk): inter-layer nn.Dropout is identity in eval mode; training-mode
        # Bernoulli masking (pltpu.prng_seed / pltpu.stateful_bernoulli) would go here.
        if l + 1 < num_layers:
            xh_ref[:, :Hp] = h_new


def _streamed_lstm_kernel(x_ref, h0_ref, c0_ref, w_ref, b_ref, h_out_ref, c_out_ref,
                          xh_ref, acc_ref, *, Imax, Hp, tk):
    """One grid step == one (layer, K-tile).  Weights stream in (1, tk, 4Hp) blocks so the
    double-buffered weight footprint stays bounded (fits v7x's 64 MiB VMEM at large H).

    x_ref  : [B, Imax]    layer-0 input (resident; same block every step)
    h0_ref : [1, B, Hp]   this layer's initial hidden state
    c0_ref : [1, B, Hp]   this layer's initial cell state
    w_ref  : [1, tk, 4Hp] bf16 weight K-tile
    b_ref  : [1, 1, 4Hp]  f32 bias
    h_out_ref, c_out_ref : [1, B, Hp]
    xh_ref : [nk, B, tk]  persistent f32 scratch: fused [x | h] operand, blocked along K
    acc_ref: [B, 4Hp]     persistent f32 gate accumulator
    """
    l = pl.program_id(0)
    k = pl.program_id(1)
    num_layers = pl.num_programs(0)
    nk = pl.num_programs(1)
    nx = Imax // tk          # K-blocks holding the layer input
    nh = Hp // tk            # K-blocks holding the recurrent h

    @pl.when(k == 0)
    def _init():
        @pl.when(l == 0)
        def _():
            for j in range(nx):
                xh_ref[j] = x_ref[:, j * tk:(j + 1) * tk].astype(jnp.float32)
        for j in range(nh):
            xh_ref[nx + j] = h0_ref[0][:, j * tk:(j + 1) * tk].astype(jnp.float32)
        acc_ref[...] = jnp.zeros_like(acc_ref)

    # One K-tile of the fused matmul (bf16 operands, f32 accumulate).
    a = xh_ref[k].astype(w_ref.dtype)
    acc_ref[...] += jnp.dot(a, w_ref[0], preferred_element_type=jnp.float32)

    @pl.when(k == nk - 1)
    def _finish():
        gates = acc_ref[...] + b_ref[0].astype(jnp.float32)
        h_new, c_new = _lstm_gate_math(gates, c0_ref[0].astype(jnp.float32), Hp)
        h_out_ref[0] = h_new.astype(h_out_ref.dtype)
        c_out_ref[0] = c_new.astype(c_out_ref.dtype)
        # Carry h forward as the next layer's input.  Blocks [nh, nx) (if any) keep stale
        # layer-0 data; the matching weight rows of layers > 0 are zero, so no re-zeroing.
        # TODO(synk): training-mode inter-layer dropout would mask h_new here.
        @pl.when(l + 1 < num_layers)
        def _():
            for j in range(nh):
                xh_ref[j] = h_new[:, j * tk:(j + 1) * tk]


def stacked_lstm_forward(x, hidden, w_all, b_all, *, mode="auto", block_k=None,
                         vmem_limit_bytes=64 * 1024 * 1024):
    """Mirrors StackedLSTM.forward (eval mode): returns (output, (h_1, c_1)).

    x      : [B, input_size]
    hidden : (h_0, c_0), each [num_layers, B, hidden_size]
    w_all  : [num_layers, Imax+Hp, 4*Hp]  (see stack_params; bf16 by default)
    b_all  : [num_layers, 1, 4*Hp]        f32
    """
    h_0, c_0 = hidden
    L, B, H = h_0.shape
    I = x.shape[-1]
    Hp = w_all.shape[2] // 4
    IH = w_all.shape[1]
    Imax = IH - Hp
    assert Hp >= H and Imax >= I
    Bp = _round_up(B, 8)

    # Zero-pad activations to the lane/sublane-aligned kernel layout (identity when the
    # production B / H / input_size are already aligned).
    x_pad = jnp.pad(x, ((0, Bp - B), (0, Imax - I)))
    h0_pad = jnp.pad(h_0, ((0, 0), (0, Bp - B), (0, Hp - H)))
    c0_pad = jnp.pad(c_0, ((0, 0), (0, Bp - B), (0, Hp - H)))

    if mode == "auto":
        # Small stacks: one grid step, layers unrolled in-kernel.
        # Large stacks: stream weight K-tiles (bounded VMEM footprint, v7x-safe).
        weight_bytes = w_all.size * w_all.dtype.itemsize
        mode = "fused" if weight_bytes <= 4 * 1024 * 1024 else "stream"

    out_shapes = (jax.ShapeDtypeStruct((L, Bp, Hp), x.dtype),
                  jax.ShapeDtypeStruct((L, Bp, Hp), x.dtype))

    if mode == "fused":
        kernel = functools.partial(_fused_lstm_kernel, num_layers=L, Imax=Imax, Hp=Hp)
        h_p, c_p = pl.pallas_call(
            kernel,
            out_shape=out_shapes,
            scratch_shapes=[pltpu.VMEM((Bp, IH), jnp.float32)],
            compiler_params=pltpu.CompilerParams(vmem_limit_bytes=vmem_limit_bytes),
        )(x_pad, h0_pad, c0_pad, w_all, b_all)
    elif mode == "stream":
        tk = block_k
        if tk is None:
            tk = 128
            for cand in (512, 256, 128):
                if Imax % cand == 0 and Hp % cand == 0:
                    tk = cand
                    break
        assert Imax % tk == 0 and Hp % tk == 0
        nk = IH // tk
        kernel = functools.partial(_streamed_lstm_kernel, Imax=Imax, Hp=Hp, tk=tk)
        h_p, c_p = pl.pallas_call(
            kernel,
            out_shape=out_shapes,
            grid_spec=pltpu.PrefetchScalarGridSpec(
                num_scalar_prefetch=0,
                grid=(L, nk),   # layer carry and K reduction are both sequential
                in_specs=[
                    pl.BlockSpec((Bp, Imax), lambda l, k: (0, 0)),          # x (resident)
                    pl.BlockSpec((1, Bp, Hp), lambda l, k: (l, 0, 0)),      # h_0[l]
                    pl.BlockSpec((1, Bp, Hp), lambda l, k: (l, 0, 0)),      # c_0[l]
                    # NOTE: on v6e, pipeline_mode=pl.Buffered(3) here hides more HBM
                    # latency; keep default double-buffering for v7x's smaller VMEM.
                    pl.BlockSpec((1, tk, 4 * Hp), lambda l, k: (l, k, 0)),  # W[l] K-tile
                    pl.BlockSpec((1, 1, 4 * Hp), lambda l, k: (l, 0, 0)),   # bias[l]
                ],
                out_specs=(pl.BlockSpec((1, Bp, Hp), lambda l, k: (l, 0, 0)),
                           pl.BlockSpec((1, Bp, Hp), lambda l, k: (l, 0, 0))),
                scratch_shapes=[pltpu.VMEM((nk, Bp, tk), jnp.float32),
                                pltpu.VMEM((Bp, 4 * Hp), jnp.float32)],
            ),
            compiler_params=pltpu.CompilerParams(
                dimension_semantics=("arbitrary", "arbitrary"),
                vmem_limit_bytes=vmem_limit_bytes),
        )(x_pad, h0_pad, c0_pad, w_all, b_all)
    else:
        raise ValueError(f"unknown mode {mode!r}")

    # Strip padding (identity at aligned production shapes).
    h_1 = h_p[:, :B, :H]
    c_1 = c_p[:, :B, :H]
    return h_1[-1], (h_1, c_1)


def init_raw_params(key, num_layers, input_size, hidden_size, dtype=jnp.float32):
    """PyTorch-layout LSTMCell params: (w_ih [4H,I_l], w_hh [4H,H], b_ih [4H], b_hh [4H]),
    initialized U(-1/sqrt(H), 1/sqrt(H)) like nn.LSTMCell."""
    params = []
    bound = 1.0 / math.sqrt(hidden_size)
    in_sz = input_size
    for _ in range(num_layers):
        key, k1, k2, k3, k4 = jax.random.split(key, 5)
        w_ih = jax.random.uniform(k1, (4 * hidden_size, in_sz), dtype, -bound, bound)
        w_hh = jax.random.uniform(k2, (4 * hidden_size, hidden_size), dtype, -bound, bound)
        b_ih = jax.random.uniform(k3, (4 * hidden_size,), dtype, -bound, bound)
        b_hh = jax.random.uniform(k4, (4 * hidden_size,), dtype, -bound, bound)
        params.append((w_ih, w_hh, b_ih, b_hh))
        in_sz = hidden_size
    return params


def stack_params(raw_params, input_size, hidden_size, weight_dtype=jnp.bfloat16):
    """Pack per-layer PyTorch LSTMCell params for the kernels (once, outside the hot path).

    Padded widths: Hp = roundup(H, 128), Imax = max(roundup(input_size, 128), Hp).
      W[l] : [Imax+Hp, 4*Hp]  rows [0, in_l)        = W_ih^T
                              rows [Imax, Imax+H)   = W_hh^T
                              gate g occupies columns [g*Hp, g*Hp+H); everything else zero.
      b[l] : [1, 4*Hp]        b_ih + b_hh, gate-padded (kept f32).
    Weights are cast to `weight_dtype` (bf16 default) ONCE here, halving HBM->VMEM traffic
    and the double-buffered weight VMEM footprint.
    """
    H = hidden_size
    Hp = _round_up(H, 128)
    Imax = max(_round_up(input_size, 128), Hp)
    IH = Imax + Hp
    w_all, b_all = [], []
    in_sz = input_size
    for (w_ih, w_hh, b_ih, b_hh) in raw_params:
        W = jnp.zeros((IH, 4 * Hp), jnp.float32)
        b = jnp.zeros((4 * Hp,), jnp.float32)
        for g in range(4):                     # PyTorch gate order (i, f, g, o)
            W = W.at[:in_sz, g * Hp:g * Hp + H].set(w_ih[g * H:(g + 1) * H, :].T)
            W = W.at[Imax:Imax + H, g * Hp:g * Hp + H].set(w_hh[g * H:(g + 1) * H, :].T)
            b = b.at[g * Hp:g * Hp + H].set(b_ih[g * H:(g + 1) * H] + b_hh[g * H:(g + 1) * H])
        w_all.append(W)
        b_all.append(b[None, :])
        in_sz = hidden_size
    return jnp.stack(w_all).astype(weight_dtype), jnp.stack(b_all)


def reference_forward(x, hidden, raw_params):
    """Pure-JAX reference mirroring the PyTorch module (eval mode)."""
    h_0, c_0 = hidden
    H = h_0.shape[-1]
    h_1, c_1 = [], []
    inp = x
    for i, (w_ih, w_hh, b_ih, b_hh) in enumerate(raw_params):
        gates = inp @ w_ih.T + h_0[i] @ w_hh.T + b_ih + b_hh
        i_g = jax.nn.sigmoid(gates[:, 0 * H:1 * H])
        f_g = jax.nn.sigmoid(gates[:, 1 * H:2 * H])
        g_g = jnp.tanh(gates[:, 2 * H:3 * H])
        o_g = jax.nn.sigmoid(gates[:, 3 * H:4 * H])
        c = f_g * c_0[i] + i_g * g_g
        h = o_g * jnp.tanh(c)
        inp = h
        h_1.append(h)
        c_1.append(c)
    return inp, (jnp.stack(h_1), jnp.stack(c_1))


if __name__ == "__main__":
    num_layers = 2
    input_size = 32
    hidden_size = 32
    batch = 8

    key = jax.random.PRNGKey(0)
    key, kx, kh, kc, kp = jax.random.split(key, 5)

    x = jax.random.normal(kx, (batch, input_size), jnp.float32)
    h_0 = jax.random.normal(kh, (num_layers, batch, hidden_size), jnp.float32)
    c_0 = jax.random.normal(kc, (num_layers, batch, hidden_size), jnp.float32)

    raw_params = init_raw_params(kp, num_layers, input_size, hidden_size)
    w_all, b_all = stack_params(raw_params, input_size, hidden_size)  # bf16 weights

    # Reference uses the same bf16-rounded weight matrices so the check isolates kernel
    # structure from the (intentional) weight quantization.
    def _r(w):
        return w.astype(jnp.bfloat16).astype(jnp.float32)
    ref_params = [(_r(wi), _r(wh), bi, bh) for (wi, wh, bi, bh) in raw_params]
    ref_out, (ref_h1, ref_c1) = reference_forward(x, (h_0, c_0), ref_params)

    # Exercise both the small-config fused path and the weight-streaming path.
    for mode in ("fused", "stream"):
        out, (h_1, c_1) = stacked_lstm_forward(x, (h_0, c_0), w_all, b_all, mode=mode)
        jax.block_until_ready((out, h_1, c_1))

        assert out.shape == (batch, hidden_size)
        assert h_1.shape == (num_layers, batch, hidden_size)
        assert c_1.shape == (num_layers, batch, hidden_size)
        assert bool(jnp.allclose(out, ref_out, atol=2e-2, rtol=2e-2)), mode
        assert bool(jnp.allclose(h_1, ref_h1, atol=2e-2, rtol=2e-2)), mode
        assert bool(jnp.allclose(c_1, ref_c1, atol=2e-2, rtol=2e-2)), mode

    print("KERNEL_OK")
</pallas_src>

<mosaic_0001>
module attributes {stable_mosaic.version = 11 : i64} {
  func.func @_fused_lstm_kernel(%arg0: memref<8x128xf32, #tpu.memory_space<vmem>>, %arg1: memref<2x8x128xf32, #tpu.memory_space<vmem>>, %arg2: memref<2x8x128xf32, #tpu.memory_space<vmem>>, %arg3: memref<2x256x512xbf16, #tpu.memory_space<vmem>>, %arg4: memref<2x1x512xf32, #tpu.memory_space<vmem>>, %arg5: memref<2x8x128xf32, #tpu.memory_space<vmem>>, %arg6: memref<2x8x128xf32, #tpu.memory_space<vmem>>, %arg7: memref<8x256xf32, #tpu.memory_space<vmem>>) attributes {dimension_semantics = [], scalar_prefetch = 0 : i64, scratch_operands = 1 : i64, tpu.core_type = #tpu.core_type<tc>} {
    %c0 = arith.constant 0 : index
    %c0_0 = arith.constant 0 : index
    %0 = vector.load %arg0[%c0, %c0_0] : memref<8x128xf32, #tpu.memory_space<vmem>>, vector<8x128xf32>
    %c0_1 = arith.constant 0 : index
    %c0_2 = arith.constant 0 : index
    %1 = vector.load %arg7[%c0_1, %c0_2] : memref<8x256xf32, #tpu.memory_space<vmem>>, vector<8x128xf32>
    tpu.vector_store %arg7[%c0_1, %c0_2], %0 {strides = array<i32>} : memref<8x256xf32, #tpu.memory_space<vmem>>, vector<8x128xf32>,
    %c0_3 = arith.constant 0 : index
    %c0_4 = arith.constant 0 : index
    %c0_5 = arith.constant 0 : index
    %2 = vector.load %arg1[%c0_3, %c0_4, %c0_5] : memref<2x8x128xf32, #tpu.memory_space<vmem>>, vector<1x8x128xf32>
    %3 = vector.shape_cast %2 : vector<1x8x128xf32> to vector<8x128xf32>
    %c0_6 = arith.constant 0 : index
    %c128 = arith.constant 128 : index
    %4 = vector.load %arg7[%c0_6, %c128] : memref<8x256xf32, #tpu.memory_space<vmem>>, vector<8x128xf32>
    tpu.vector_store %arg7[%c0_6, %c128], %3 {strides = array<i32>} : memref<8x256xf32, #tpu.memory_space<vmem>>, vector<8x128xf32>,
    %c0_7 = arith.constant 0 : index
    %c0_8 = arith.constant 0 : index
    %5 = vector.load %arg7[%c0_7, %c0_8] : memref<8x256xf32, #tpu.memory_space<vmem>>, vector<8x256xf32>
    %6 = arith.truncf %5 : vector<8x256xf32> to vector<8x256xbf16>
    %c0_9 = arith.constant 0 : index
    %c0_10 = arith.constant 0 : index
    %c0_11 = arith.constant 0 : index
    %7 = vector.load %arg3[%c0_9, %c0_10, %c0_11] : memref<2x256x512xbf16, #tpu.memory_space<vmem>>, vector<1x256x512xbf16>
    %8 = vector.shape_cast %7 : vector<1x256x512xbf16> to vector<256x512xbf16>
    %cst = arith.constant dense<0.000000e+00> : vector<8x512xf32>
    %9 = tpu.matmul %6, %8, %cst {dimension_numbers = #tpu.dot_dimension_numbers<[1], [0], [0], [1], [0, 0, 1, 1], [], []>} : vector<8x256xbf16>, vector<256x512xbf16>, vector<8x512xf32> -> vector<8x512xf32>
    %c0_12 = arith.constant 0 : index
    %c0_13 = arith.constant 0 : index
    %c0_14 = arith.constant 0 : index
    %10 = vector.load %arg4[%c0_12, %c0_13, %c0_14] : memref<2x1x512xf32, #tpu.memory_space<vmem>>, vector<1x1x512xf32>
    %11 = vector.shape_cast %10 : vector<1x1x512xf32> to vector<1x512xf32>
    %12 = vector.broadcast %11 : vector<1x512xf32> to vector<8x512xf32>
    %13 = arith.addf %9, %12 : vector<8x512xf32>
    %c0_15 = arith.constant 0 : index
    %c0_16 = arith.constant 0 : index
    %c0_17 = arith.constant 0 : index
    %14 = vector.load %arg2[%c0_15, %c0_16, %c0_17] : memref<2x8x128xf32, #tpu.memory_space<vmem>>, vector<1x8x128xf32>
    %15 = vector.shape_cast %14 : vector<1x8x128xf32> to vector<8x128xf32>
    %16 = vector.extract_strided_slice %13 {offsets = [0, 0], sizes = [8, 256], strides = [1, 1]} : vector<8x512xf32> to vector<8x256xf32>
    %17 = arith.negf %16 : vector<8x256xf32>
    %18 = math.exp %17 : vector<8x256xf32>
    %cst_18 = arith.constant 1.000000e+00 : f32
    %19 = vector.broadcast %cst_18 : f32 to vector<8x256xf32>
    %20 = arith.addf %19, %18 : vector<8x256xf32>
    %21 = arith.divf %19, %20 : vector<8x256xf32>
    %22 = vector.extract_strided_slice %21 {offsets = [0, 0], sizes = [8, 128], strides = [1, 1]} : vector<8x256xf32> to vector<8x128xf32>
    %23 = vector.extract_strided_slice %21 {offsets = [0, 128], sizes = [8, 128], strides = [1, 1]} : vector<8x256xf32> to vector<8x128xf32>
    %24 = vector.extract_strided_slice %13 {offsets = [0, 256], sizes = [8, 128], strides = [1, 1]} : vector<8x512xf32> to vector<8x128xf32>
    %25 = math.tanh %24 : vector<8x128xf32>
    %26 = vector.extract_strided_slice %13 {offsets = [0, 384], sizes = [8, 128], strides = [1, 1]} : vector<8x512xf32> to vector<8x128xf32>
    %27 = arith.negf %26 : vector<8x128xf32>
    %28 = math.exp %27 : vector<8x128xf32>
    %cst_19 = arith.constant 1.000000e+00 : f32
    %29 = vector.broadcast %cst_19 : f32 to vector<8x128xf32>
    %30 = arith.addf %29, %28 : vector<8x128xf32>
    %31 = arith.divf %29, %30 : vector<8x128xf32>
    %32 = arith.mulf %23, %15 : vector<8x128xf32>
    %33 = arith.mulf %22, %25 : vector<8x128xf32>
    %34 = arith.addf %32, %33 : vector<8x128xf32>
    %35 = math.tanh %34 : vector<8x128xf32>
    %36 = arith.mulf %31, %35 : vector<8x128xf32>
    %c0_20 = arith.constant 0 : index
    %c0_21 = arith.constant 0 : index
    %c0_22 = arith.constant 0 : index
    %37 = vector.load %arg5[%c0_20, %c0_21, %c0_22] : memref<2x8x128xf32, #tpu.memory_space<vmem>>, vector<1x8x128xf32>
    %38 = vector.shape_cast %37 : vector<1x8x128xf32> to vector<8x128xf32>
    %39 = vector.shape_cast %36 : vector<8x128xf32> to vector<1x8x128xf32>
    tpu.vector_store %arg5[%c0_20, %c0_21, %c0_22], %39 {strides = array<i32>} : memref<2x8x128xf32, #tpu.memory_space<vmem>>, vector<1x8x128xf32>,
    %c0_23 = arith.constant 0 : index
    %c0_24 = arith.constant 0 : index
    %c0_25 = arith.constant 0 : index
    %40 = vector.load %arg6[%c0_23, %c0_24, %c0_25] : memref<2x8x128xf32, #tpu.memory_space<vmem>>, vector<1x8x128xf32>
    %41 = vector.shape_cast %40 : vector<1x8x128xf32> to vector<8x128xf32>
    %42 = vector.shape_cast %34 : vector<8x128xf32> to vector<1x8x128xf32>
    tpu.vector_store %arg6[%c0_23, %c0_24, %c0_25], %42 {strides = array<i32>} : memref<2x8x128xf32, #tpu.memory_space<vmem>>, vector<1x8x128xf32>,
    %c0_26 = arith.constant 0 : index
    %c0_27 = arith.constant 0 : index
    %43 = vector.load %arg7[%c0_26, %c0_27] : memref<8x256xf32, #tpu.memory_space<vmem>>, vector<8x128xf32>
    tpu.vector_store %arg7[%c0_26, %c0_27], %36 {strides = array<i32>} : memref<8x256xf32, #tpu.memory_space<vmem>>, vector<8x128xf32>,
    %c1 = arith.constant 1 : index
    %c0_28 = arith.constant 0 : index
    %c0_29 = arith.constant 0 : index
    %44 = vector.load %arg1[%c1, %c0_28, %c0_29] : memref<2x8x128xf32, #tpu.memory_space<vmem>>, vector<1x8x128xf32>
    %45 = vector.shape_cast %44 : vector<1x8x128xf32> to vector<8x128xf32>
    %c0_30 = arith.constant 0 : index
    %c128_31 = arith.constant 128 : index
    %46 = vector.load %arg7[%c0_30, %c128_31] : memref<8x256xf32, #tpu.memory_space<vmem>>, vector<8x128xf32>
    tpu.vector_store %arg7[%c0_30, %c128_31], %45 {strides = array<i32>} : memref<8x256xf32, #tpu.memory_space<vmem>>, vector<8x128xf32>,
    %c0_32 = arith.constant 0 : index
    %c0_33 = arith.constant 0 : index
    %47 = vector.load %arg7[%c0_32, %c0_33] : memref<8x256xf32, #tpu.memory_space<vmem>>, vector<8x256xf32>
    %48 = arith.truncf %47 : vector<8x256xf32> to vector<8x256xbf16>
    %c1_34 = arith.constant 1 : index
    %c0_35 = arith.constant 0 : index
    %c0_36 = arith.constant 0 : index
    %49 = vector.load %arg3[%c1_34, %c0_35, %c0_36] : memref<2x256x512xbf16, #tpu.memory_space<vmem>>, vector<1x256x512xbf16>
    %50 = vector.shape_cast %49 : vector<1x256x512xbf16> to vector<256x512xbf16>
    %cst_37 = arith.constant dense<0.000000e+00> : vector<8x512xf32>
    %51 = tpu.matmul %48, %50, %cst_37 {dimension_numbers = #tpu.dot_dimension_numbers<[1], [0], [0], [1], [0, 0, 1, 1], [], []>} : vector<8x256xbf16>, vector<256x512xbf16>, vector<8x512xf32> -> vector<8x512xf32>
    %c1_38 = arith.constant 1 : index
    %c0_39 = arith.constant 0 : index
    %c0_40 = arith.constant 0 : index
    %52 = vector.load %arg4[%c1_38, %c0_39, %c0_40] : memref<2x1x512xf32, #tpu.memory_space<vmem>>, vector<1x1x512xf32>
    %53 = vector.shape_cast %52 : vector<1x1x512xf32> to vector<1x512xf32>
    %54 = vector.broadcast %53 : vector<1x512xf32> to vector<8x512xf32>
    %55 = arith.addf %51, %54 : vector<8x512xf32>
    %c1_41 = arith.constant 1 : index
    %c0_42 = arith.constant 0 : index
    %c0_43 = arith.constant 0 : index
    %56 = vector.load %arg2[%c1_41, %c0_42, %c0_43] : memref<2x8x128xf32, #tpu.memory_space<vmem>>, vector<1x8x128xf32>
    %57 = vector.shape_cast %56 : vector<1x8x128xf32> to vector<8x128xf32>
    %58 = vector.extract_strided_slice %55 {offsets = [0, 0], sizes = [8, 256], strides = [1, 1]} : vector<8x512xf32> to vector<8x256xf32>
    %59 = arith.negf %58 : vector<8x256xf32>
    %60 = math.exp %59 : vector<8x256xf32>
    %cst_44 = arith.constant 1.000000e+00 : f32
    %61 = vector.broadcast %cst_44 : f32 to vector<8x256xf32>
    %62 = arith.addf %61, %60 : vector<8x256xf32>
    %63 = arith.divf %61, %62 : vector<8x256xf32>
    %64 = vector.extract_strided_slice %63 {offsets = [0, 0], sizes = [8, 128], strides = [1, 1]} : vector<8x256xf32> to vector<8x128xf32>
    %65 = vector.extract_strided_slice %63 {offsets = [0, 128], sizes = [8, 128], strides = [1, 1]} : vector<8x256xf32> to vector<8x128xf32>
    %66 = vector.extract_strided_slice %55 {offsets = [0, 256], sizes = [8, 128], strides = [1, 1]} : vector<8x512xf32> to vector<8x128xf32>
    %67 = math.tanh %66 : vector<8x128xf32>
    %68 = vector.extract_strided_slice %55 {offsets = [0, 384], sizes = [8, 128], strides = [1, 1]} : vector<8x512xf32> to vector<8x128xf32>
    %69 = arith.negf %68 : vector<8x128xf32>
    %70 = math.exp %69 : vector<8x128xf32>
    %cst_45 = arith.constant 1.000000e+00 : f32
    %71 = vector.broadcast %cst_45 : f32 to vector<8x128xf32>
    %72 = arith.addf %71, %70 : vector<8x128xf32>
    %73 = arith.divf %71, %72 : vector<8x128xf32>
    %74 = arith.mulf %65, %57 : vector<8x128xf32>
    %75 = arith.mulf %64, %67 : vector<8x128xf32>
    %76 = arith.addf %74, %75 : vector<8x128xf32>
    %77 = math.tanh %76 : vector<8x128xf32>
    %78 = arith.mulf %73, %77 : vector<8x128xf32>
    %c1_46 = arith.constant 1 : index
    %c0_47 = arith.constant 0 : index
    %c0_48 = arith.constant 0 : index
    %79 = vector.load %arg5[%c1_46, %c0_47, %c0_48] : memref<2x8x128xf32, #tpu.memory_space<vmem>>, vector<1x8x128xf32>
    %80 = vector.shape_cast %79 : vector<1x8x128xf32> to vector<8x128xf32>
    %81 = vector.shape_cast %78 : vector<8x128xf32> to vector<1x8x128xf32>
    tpu.vector_store %arg5[%c1_46, %c0_47, %c0_48], %81 {strides = array<i32>} : memref<2x8x128xf32, #tpu.memory_space<vmem>>, vector<1x8x128xf32>,
    %c1_49 = arith.constant 1 : index
    %c0_50 = arith.constant 0 : index
    %c0_51 = arith.constant 0 : index
    %82 = vector.load %arg6[%c1_49, %c0_50, %c0_51] : memref<2x8x128xf32, #tpu.memory_space<vmem>>, vector<1x8x128xf32>
    %83 = vector.shape_cast %82 : vector<1x8x128xf32> to vector<8x128xf32>
    %84 = vector.shape_cast %76 : vector<8x128xf32> to vector<1x8x128xf32>
    tpu.vector_store %arg6[%c1_49, %c0_50, %c0_51], %84 {strides = array<i32>} : memref<2x8x128xf32, #tpu.memory_space<vmem>>, vector<1x8x128xf32>,
    return
  }
}

</mosaic_0001>

<llo_original>
// kernel: tpu_custom_call.1
$region0: #{tpu_custom_call.1}
  #allocation0 [shape = 'u32[]', space=smem, size = 0x4, offset = 0x4, fixed_abs, tag = 'smem constant byte address 0x4 - core index']
  #allocation1 [shape = 'u32[144,128]{1,0:T(1,128)}', space=vmem, size = 0x12000, scoped, tag = 'internal scratch']
  #allocation2 [shape = 'f32[8,256]{1,0:T(8,128)}', space=vmem, size = 0x2000, scoped, tag = 'scratch operand']
  %s0 = inlined_call_operand.hbm [shape: f32[8,128], index: 0, kind: input, shape index: {}]
  %s1 = inlined_call_operand.hbm [shape: f32[2,8,128], index: 1, kind: input, shape index: {}]
  %s2 = inlined_call_operand.hbm [shape: f32[2,8,128], index: 2, kind: input, shape index: {}]
  %s3 = inlined_call_operand.hbm [shape: bf16[2,256,512], index: 3, kind: input, shape index: {}]
  %s4 = inlined_call_operand.hbm [shape: f32[2,1,512], index: 4, kind: input, shape index: {}]
  %s5 = inlined_call_operand.hbm [shape: f32[2,8,128], index: 5, kind: output, shape index: {0}]
  %s6 = inlined_call_operand.hbm [shape: f32[2,8,128], index: 6, kind: output, shape index: {1}]
  %7 = xla_tuple %s5, %s6
  %s8 = sld [smem:[#allocation0]]
  $region58: #{tpu_custom_call.1} parent=0
    _
  %s10 = ssub.s32 1, %s8
  %s11 = scalar_select 0, %s10, %s8
  $region1: #{tpu_custom_call.1} parent=0
    #allocation3 [shape = 'u8[4096]{0}', space=vmem, size = 0x1000, scoped, tag = 'input window, operand 0, single buffered']
    #allocation4 [shape = 's32[1]{0}', space=sflag, size = 0x4, scoped, tag = 'scoped memory for tpu_custom_call.1']
    #allocation5 [shape = 's32[1]{0}', space=sflag, size = 0x4, scoped, tag = 'scoped memory for tpu_custom_call.1']
    #allocation6 [shape = 'u8[8192]{0}', space=vmem, size = 0x2000, scoped, tag = 'input window, operand 1, single buffered']
    #allocation7 [shape = 's32[1]{0}', space=sflag, size = 0x4, scoped, tag = 'scoped memory for tpu_custom_call.1']
    #allocation8 [shape = 'u8[8192]{0}', space=vmem, size = 0x2000, scoped, tag = 'input window, operand 2, single buffered']
    #allocation9 [shape = 'u8[524288]{0}', space=vmem, size = 0x80000, scoped, tag = 'input window, operand 3, single buffered']
    #allocation10 [shape = 's32[1]{0}', space=sflag, size = 0x4, scoped, tag = 'scoped memory for tpu_custom_call.1']
    #allocation11 [shape = 'u8[4096]{0}', space=vmem, size = 0x1000, scoped, tag = 'input window, operand 4, single buffered']
    #allocation12 [shape = 'u8[8192]{0}', space=vmem, size = 0x2000, scoped, tag = 'output window, operand 0, single buffered']
    #allocation13 [shape = 'u8[8192]{0}', space=vmem, size = 0x2000, scoped, tag = 'output window, operand 1, single buffered']
    #allocation14 [shape = 's32[1]{0}', space=sflag, size = 0x4, scoped, tag = 'scoped memory for tpu_custom_call.1']
    %12 = vsyncpa [#allocation4], 0
    %13 = vsyncpa [#allocation7], 0
    %14 = vsyncpa [#allocation10], 0
    %15 = vsyncpa [#allocation5], 0
    %16 = vsyncpa [#allocation14], 0
    // Predicated region
    $region2: #{tpu_custom_call.1} parent=1 // pred_check
      _
    $region3: #{tpu_custom_call.1} parent=1 // pred_check_branch
      %18 = sbr.rel (0) target = $region5
    $region4: #{tpu_custom_call.1} parent=1 // pred_region
      %s20 = ssub.s32 128, 128
      %21 = vsyncadd [#allocation4], %s20
      %s23 = sshll.u32 [#allocation3], 4
      %s24 = int_to_ptr.vmem [resolvable:$true] %s23
      %26 = dma.hbm_to_vmem [thread:$0]  %s0, 128, %s24, [#allocation4]
    $region5: #{tpu_custom_call.1} parent=1 // pred_fallthru
      _
    // Predicated region
    $region6: #{tpu_custom_call.1} parent=1 // pred_check
      _
    $region7: #{tpu_custom_call.1} parent=1 // pred_check_branch
      %28 = sbr.rel (0) target = $region9
    $region8: #{tpu_custom_call.1} parent=1 // pred_region
      %s30 = ssub.s32 256, 256
      %31 = vsyncadd [#allocation7], %s30
      %s32 = sshll.u32 [#allocation6], 4
      %s33 = int_to_ptr.vmem [resolvable:$true] %s32
      %38 = dma.hbm_to_vmem [thread:$0]  %s1, 256, %s33, [#allocation7], 128, 128, 8
    $region9: #{tpu_custom_call.1} parent=1 // pred_fallthru
      _
    // Predicated region
    $region10: #{tpu_custom_call.1} parent=1 // pred_check
      _
    $region11: #{tpu_custom_call.1} parent=1 // pred_check_branch
      %40 = sbr.rel (0) target = $region13
    $region12: #{tpu_custom_call.1} parent=1 // pred_region
      %s42 = ssub.s32 256, 256
      %43 = vsyncadd [#allocation7], %s42
      %s44 = sshll.u32 [#allocation8], 4
      %s45 = int_to_ptr.vmem [resolvable:$true] %s44
      %50 = dma.hbm_to_vmem [thread:$0]  %s2, 256, %s45, [#allocation7], 128, 128, 8
    $region13: #{tpu_custom_call.1} parent=1 // pred_fallthru
      _
    // Predicated region
    $region14: #{tpu_custom_call.1} parent=1 // pred_check
      _
    $region15: #{tpu_custom_call.1} parent=1 // pred_check_branch
      %52 = sbr.rel (0) target = $region17
    $region16: #{tpu_custom_call.1} parent=1 // pred_region
      %s54 = ssub.s32 16384, 16384
      %55 = vsyncadd [#allocation10], %s54
      %s56 = sshll.u32 [#allocation9], 4
      %s57 = int_to_ptr.vmem [resolvable:$true] %s56
      %62 = dma.hbm_to_vmem [thread:$0]  %s3, 16384, %s57, [#allocation10], 256, 256, 16
    $region17: #{tpu_custom_call.1} parent=1 // pred_fallthru
      _
    // Predicated region
    $region18: #{tpu_custom_call.1} parent=1 // pred_check
      _
    $region19: #{tpu_custom_call.1} parent=1 // pred_check_branch
      %64 = sbr.rel (0) target = $region21
    $region20: #{tpu_custom_call.1} parent=1 // pred_region
      %s66 = ssub.s32 128, 128
      %67 = vsyncadd [#allocation10], %s66
      %s68 = sshll.u32 [#allocation11], 4
      %s69 = int_to_ptr.vmem [resolvable:$true] %s68
      %74 = dma.hbm_to_vmem [thread:$0]  %s4, 128, %s69, [#allocation10], 64, 64, 4
    $region21: #{tpu_custom_call.1} parent=1 // pred_fallthru
      _
    // Predicated region
    $region22: #{tpu_custom_call.1} parent=1 // pred_check
      _
    $region23: #{tpu_custom_call.1} parent=1 // pred_check_branch
      %76 = sbr.rel (0) target = $region25
    $region24: #{tpu_custom_call.1} parent=1 // pred_region
      %77 = dma.done [#allocation4], 128
    $region25: #{tpu_custom_call.1} parent=1 // pred_fallthru
      _
    // Predicated region
    $region26: #{tpu_custom_call.1} parent=1 // pred_check
      _
    $region27: #{tpu_custom_call.1} parent=1 // pred_check_branch
      %79 = sbr.rel (0) target = $region29
    $region28: #{tpu_custom_call.1} parent=1 // pred_region
      %80 = dma.done [#allocation7], 256
    $region29: #{tpu_custom_call.1} parent=1 // pred_fallthru
      _
    // Predicated region
    $region30: #{tpu_custom_call.1} parent=1 // pred_check
      _
    $region31: #{tpu_custom_call.1} parent=1 // pred_check_branch
      %82 = sbr.rel (0) target = $region33
    $region32: #{tpu_custom_call.1} parent=1 // pred_region
      %83 = dma.done [#allocation7], 256
    $region33: #{tpu_custom_call.1} parent=1 // pred_fallthru
      _
    // Predicated region
    $region34: #{tpu_custom_call.1} parent=1 // pred_check
      _
    $region35: #{tpu_custom_call.1} parent=1 // pred_check_branch
      %85 = sbr.rel (0) target = $region37
    $region36: #{tpu_custom_call.1} parent=1 // pred_region
      %86 = dma.done [#allocation10], 16384
    $region37: #{tpu_custom_call.1} parent=1 // pred_fallthru
      _
    // Predicated region
    $region38: #{tpu_custom_call.1} parent=1 // pred_check
      _
    $region39: #{tpu_custom_call.1} parent=1 // pred_check_branch
      %88 = sbr.rel (0) target = $region41
    $region40: #{tpu_custom_call.1} parent=1 // pred_region
      %89 = dma.done [#allocation10], 128
    $region41: #{tpu_custom_call.1} parent=1 // pred_fallthru
      _
    %v90 = vld [vmem:[#allocation3] sm:$0xff]
    %91 = vst [vmem:[#allocation2] sm:$0xff] %v90
    %v92 = vld [vmem:[#allocation6] sm:$0xff]
    %93 = vst [vmem:[#allocation2 + $0x8] sm:$0xff] %v92
    %v94 = vld [vmem:[#allocation2] sm:$0xff]
    %v95 = vld [vmem:[#allocation2 + $0x8] sm:$0xff]
    %v96 = vpack.c.bf16 %v94, %v94
    %v97 = vpack.c.bf16 %v95, %v95
    %v98 = vld [vmem:[#allocation9] sm:$0xff]
    %v99 = vld [vmem:[#allocation9 + $0x8] sm:$0xff]
    %v100 = vld [vmem:[#allocation9 + $0x10] sm:$0xff]
    %v101 = vld [vmem:[#allocation9 + $0x18] sm:$0xff]
    %v102 = vld [vmem:[#allocation9 + $0x20] sm:$0xff]
    %v103 = vld [vmem:[#allocation9 + $0x28] sm:$0xff]
    %v104 = vld [vmem:[#allocation9 + $0x30] sm:$0xff]
    %v105 = vld [vmem:[#allocation9 + $0x38] sm:$0xff]
    %v106 = vld [vmem:[#allocation9 + $0x40] sm:$0xff]
    %v107 = vld [vmem:[#allocation9 + $0x48] sm:$0xff]
    %v108 = vld [vmem:[#allocation9 + $0x50] sm:$0xff]
    %v109 = vld [vmem:[#allocation9 + $0x58] sm:$0xff]
    %v110 = vld [vmem:[#allocation9 + $0x60] sm:$0xff]
    %v111 = vld [vmem:[#allocation9 + $0x68] sm:$0xff]
    %v112 = vld [vmem:[#allocation9 + $0x70] sm:$0xff]
    %v113 = vld [vmem:[#allocation9 + $0x78] sm:$0xff]
    %v114 = vld [vmem:[#allocation9 + $0x80] sm:$0xff]
    %v115 = vld [vmem:[#allocation9 + $0x88] sm:$0xff]
    %v116 = vld [vmem:[#allocation9 + $0x90] sm:$0xff]
    %v117 = vld [vmem:[#allocation9 + $0x98] sm:$0xff]
    %v118 = vld [vmem:[#allocation9 + $0xa0] sm:$0xff]
    %v119 = vld [vmem:[#allocation9 + $0xa8] sm:$0xff]
    %v120 = vld [vmem:[#allocation9 + $0xb0] sm:$0xff]
    %v121 = vld [vmem:[#allocation9 + $0xb8] sm:$0xff]
    %v122 = vld [vmem:[#allocation9 + $0xc0] sm:$0xff]
    %v123 = vld [vmem:[#allocation9 + $0xc8] sm:$0xff]
    %v124 = vld [vmem:[#allocation9 + $0xd0] sm:$0xff]
    %v125 = vld [vmem:[#allocation9 + $0xd8] sm:$0xff]
    %v126 = vld [vmem:[#allocation9 + $0xe0] sm:$0xff]
    %v127 = vld [vmem:[#allocation9 + $0xe8] sm:$0xff]
    %v128 = vld [vmem:[#allocation9 + $0xf0] sm:$0xff]
    %v129 = vld [vmem:[#allocation9 + $0xf8] sm:$0xff]
    %v130 = vld [vmem:[#allocation9 + $0x100] sm:$0xff]
    %v131 = vld [vmem:[#allocation9 + $0x108] sm:$0xff]
    %v132 = vld [vmem:[#allocation9 + $0x110] sm:$0xff]
    %v133 = vld [vmem:[#allocation9 + $0x118] sm:$0xff]
    %v134 = vld [vmem:[#allocation9 + $0x120] sm:$0xff]
    %v135 = vld [vmem:[#allocation9 + $0x128] sm:$0xff]
    %v136 = vld [vmem:[#allocation9 + $0x130] sm:$0xff]
    %v137 = vld [vmem:[#allocation9 + $0x138] sm:$0xff]
    %v138 = vld [vmem:[#allocation9 + $0x140] sm:$0xff]
    %v139 = vld [vmem:[#allocation9 + $0x148] sm:$0xff]
    %v140 = vld [vmem:[#allocation9 + $0x150] sm:$0xff]
    %v141 = vld [vmem:[#allocation9 + $0x158] sm:$0xff]
    %v142 = vld [vmem:[#allocation9 + $0x160] sm:$0xff]
    %v143 = vld [vmem:[#allocation9 + $0x168] sm:$0xff]
    %v144 = vld [vmem:[#allocation9 + $0x170] sm:$0xff]
    %v145 = vld [vmem:[#allocation9 + $0x178] sm:$0xff]
    %v146 = vld [vmem:[#allocation9 + $0x180] sm:$0xff]
    %v147 = vld [vmem:[#allocation9 + $0x188] sm:$0xff]
    %v148 = vld [vmem:[#allocation9 + $0x190] sm:$0xff]
    %v149 = vld [vmem:[#allocation9 + $0x198] sm:$0xff]
    %v150 = vld [vmem:[#allocation9 + $0x1a0] sm:$0xff]
    %v151 = vld [vmem:[#allocation9 + $0x1a8] sm:$0xff]
    %v152 = vld [vmem:[#allocation9 + $0x1b0] sm:$0xff]
    %v153 = vld [vmem:[#allocation9 + $0x1b8] sm:$0xff]
    %v154 = vld [vmem:[#allocation9 + $0x1c0] sm:$0xff]
    %v155 = vld [vmem:[#allocation9 + $0x1c8] sm:$0xff]
    %v156 = vld [vmem:[#allocation9 + $0x1d0] sm:$0xff]
    %v157 = vld [vmem:[#allocation9 + $0x1d8] sm:$0xff]
    %v158 = vld [vmem:[#allocation9 + $0x1e0] sm:$0xff]
    %v159 = vld [vmem:[#allocation9 + $0x1e8] sm:$0xff]
    %v160 = vld [vmem:[#allocation9 + $0x1f0] sm:$0xff]
    %v161 = vld [vmem:[#allocation9 + $0x1f8] sm:$0xff]
    %v162 = vld [vmem:[#allocation11] sm:$0xf]
    %v164 = vlaneseq
    %v165 = vshrl.u32 %v164, 7
    %v166 = vsub.s32 0, %v165
    %v167 = vrot.slane %v162, %v166
    %v168 = vlaneseq
    %v169 = vshrl.u32 %v168, 7
    %v170 = vsub.s32 1, %v169
    %v171 = vrot.slane %v162, %v170
    %v172 = vlaneseq
    %v173 = vshrl.u32 %v172, 7
    %v174 = vsub.s32 2, %v173
    %v175 = vrot.slane %v162, %v174
    %v176 = vlaneseq
    %v177 = vshrl.u32 %v176, 7
    %v178 = vsub.s32 3, %v177
    %v179 = vrot.slane %v162, %v178
    %v248 = vunpack.c.l.b16 %v98
    %v249 = vunpack.c.h.b16 %v98
    %v250 = vunpack.c.l.b16 %v99
    %v251 = vunpack.c.h.b16 %v99
    %v252 = vunpack.c.l.b16 %v100
    %v253 = vunpack.c.h.b16 %v100
    %v254 = vunpack.c.l.b16 %v101
    %v255 = vunpack.c.h.b16 %v101
    %v256 = vunpack.c.l.b16 %v102
    %v257 = vunpack.c.h.b16 %v102
    %v258 = vunpack.c.l.b16 %v103
    %v259 = vunpack.c.h.b16 %v103
    %v260 = vunpack.c.l.b16 %v104
    %v261 = vunpack.c.h.b16 %v104
    %v262 = vunpack.c.l.b16 %v105
    %v263 = vunpack.c.h.b16 %v105
    %v264 = vunpack.c.l.b16 %v106
    %v265 = vunpack.c.h.b16 %v106
    %v266 = vunpack.c.l.b16 %v107
    %v267 = vunpack.c.h.b16 %v107
    %v268 = vunpack.c.l.b16 %v108
    %v269 = vunpack.c.h.b16 %v108
    %v270 = vunpack.c.l.b16 %v109
    %v271 = vunpack.c.h.b16 %v109
    %v272 = vunpack.c.l.b16 %v110
    %v273 = vunpack.c.h.b16 %v110
    %v274 = vunpack.c.l.b16 %v111
    %v275 = vunpack.c.h.b16 %v111
    %v276 = vunpack.c.l.b16 %v112
    %v277 = vunpack.c.h.b16 %v112
    %v278 = vunpack.c.l.b16 %v113
    %v279 = vunpack.c.h.b16 %v113
    %v280 = vunpack.c.l.b16 %v114
    %v281 = vunpack.c.h.b16 %v114
    %v282 = vunpack.c.l.b16 %v115
    %v283 = vunpack.c.h.b16 %v115
    %v284 = vunpack.c.l.b16 %v116
    %v285 = vunpack.c.h.b16 %v116
    %v286 = vunpack.c.l.b16 %v117
    %v287 = vunpack.c.h.b16 %v117
    %v288 = vunpack.c.l.b16 %v118
    %v289 = vunpack.c.h.b16 %v118
    %v290 = vunpack.c.l.b16 %v119
    %v291 = vunpack.c.h.b16 %v119
    %v292 = vunpack.c.l.b16 %v120
    %v293 = vunpack.c.h.b16 %v120
    %v294 = vunpack.c.l.b16 %v121
    %v295 = vunpack.c.h.b16 %v121
    %v296 = vunpack.c.l.b16 %v122
    %v297 = vunpack.c.h.b16 %v122
    %v298 = vunpack.c.l.b16 %v123
    %v299 = vunpack.c.h.b16 %v123
    %v300 = vunpack.c.l.b16 %v124
    %v301 = vunpack.c.h.b16 %v124
    %v302 = vunpack.c.l.b16 %v125
    %v303 = vunpack.c.h.b16 %v125
    %v304 = vunpack.c.l.b16 %v126
    %v305 = vunpack.c.h.b16 %v126
    %v306 = vunpack.c.l.b16 %v127
    %v307 = vunpack.c.h.b16 %v127
    %v308 = vunpack.c.l.b16 %v128
    %v309 = vunpack.c.h.b16 %v128
    %v310 = vunpack.c.l.b16 %v129
    %v311 = vunpack.c.h.b16 %v129
    %v312 = vunpack.c.l.b16 %v130
    %v313 = vunpack.c.h.b16 %v130
    %v314 = vunpack.c.l.b16 %v131
    %v315 = vunpack.c.h.b16 %v131
    %v316 = vunpack.c.l.b16 %v132
    %v317 = vunpack.c.h.b16 %v132
    %v318 = vunpack.c.l.b16 %v133
    %v319 = vunpack.c.h.b16 %v133
    %v320 = vunpack.c.l.b16 %v134
    %v321 = vunpack.c.h.b16 %v134
    %v322 = vunpack.c.l.b16 %v135
    %v323 = vunpack.c.h.b16 %v135
    %v324 = vunpack.c.l.b16 %v136
    %v325 = vunpack.c.h.b16 %v136
    %v326 = vunpack.c.l.b16 %v137
    %v327 = vunpack.c.h.b16 %v137
    %v328 = vunpack.c.l.b16 %v138
    %v329 = vunpack.c.h.b16 %v138
    %v330 = vunpack.c.l.b16 %v139
    %v331 = vunpack.c.h.b16 %v139
    %v332 = vunpack.c.l.b16 %v140
    %v333 = vunpack.c.h.b16 %v140
    %v334 = vunpack.c.l.b16 %v141
    %v335 = vunpack.c.h.b16 %v141
    %v336 = vunpack.c.l.b16 %v142
    %v337 = vunpack.c.h.b16 %v142
    %v338 = vunpack.c.l.b16 %v143
    %v339 = vunpack.c.h.b16 %v143
    %v340 = vunpack.c.l.b16 %v144
    %v341 = vunpack.c.h.b16 %v144
    %v342 = vunpack.c.l.b16 %v145
    %v343 = vunpack.c.h.b16 %v145
    %v344 = vunpack.c.l.b16 %v146
    %v345 = vunpack.c.h.b16 %v146
    %v346 = vunpack.c.l.b16 %v147
    %v347 = vunpack.c.h.b16 %v147
    %v348 = vunpack.c.l.b16 %v148
    %v349 = vunpack.c.h.b16 %v148
    %v350 = vunpack.c.l.b16 %v149
    %v351 = vunpack.c.h.b16 %v149
    %v352 = vunpack.c.l.b16 %v150
    %v353 = vunpack.c.h.b16 %v150
    %v354 = vunpack.c.l.b16 %v151
    %v355 = vunpack.c.h.b16 %v151
    %v356 = vunpack.c.l.b16 %v152
    %v357 = vunpack.c.h.b16 %v152
    %v358 = vunpack.c.l.b16 %v153
    %v359 = vunpack.c.h.b16 %v153
    %v360 = vunpack.c.l.b16 %v154
    %v361 = vunpack.c.h.b16 %v154
    %v362 = vunpack.c.l.b16 %v155
    %v363 = vunpack.c.h.b16 %v155
    %v364 = vunpack.c.l.b16 %v156
    %v365 = vunpack.c.h.b16 %v156
    %v366 = vunpack.c.l.b16 %v157
    %v367 = vunpack.c.h.b16 %v157
    %v368 = vunpack.c.l.b16 %v158
    %v369 = vunpack.c.h.b16 %v158
    %v370 = vunpack.c.l.b16 %v159
    %v371 = vunpack.c.h.b16 %v159
    %v372 = vunpack.c.l.b16 %v160
    %v373 = vunpack.c.h.b16 %v160
    %v374 = vunpack.c.l.b16 %v161
    %v375 = vunpack.c.h.b16 %v161
    %v376 = vpack.c.b16 %v252, %v248
    %v377 = vpack.c.b16 %v253, %v249
    %v378 = vpack.c.b16 %v254, %v250
    %v379 = vpack.c.b16 %v255, %v251
    %v380 = vpack.c.b16 %v260, %v256
    %v381 = vpack.c.b16 %v261, %v257
    %v382 = vpack.c.b16 %v262, %v258
    %v383 = vpack.c.b16 %v263, %v259
    %v384 = vpack.c.b16 %v268, %v264
    %v385 = vpack.c.b16 %v269, %v265
    %v386 = vpack.c.b16 %v270, %v266
    %v387 = vpack.c.b16 %v271, %v267
    %v388 = vpack.c.b16 %v276, %v272
    %v389 = vpack.c.b16 %v277, %v273
    %v390 = vpack.c.b16 %v278, %v274
    %v391 = vpack.c.b16 %v279, %v275
    %v392 = vpack.c.b16 %v284, %v280
    %v393 = vpack.c.b16 %v285, %v281
    %v394 = vpack.c.b16 %v286, %v282
    %v395 = vpack.c.b16 %v287, %v283
    %v396 = vpack.c.b16 %v292, %v288
    %v397 = vpack.c.b16 %v293, %v289
    %v398 = vpack.c.b16 %v294, %v290
    %v399 = vpack.c.b16 %v295, %v291
    %v400 = vpack.c.b16 %v300, %v296
    %v401 = vpack.c.b16 %v301, %v297
    %v402 = vpack.c.b16 %v302, %v298
    %v403 = vpack.c.b16 %v303, %v299
    %v404 = vpack.c.b16 %v308, %v304
    %v405 = vpack.c.b16 %v309, %v305
    %v406 = vpack.c.b16 %v310, %v306
    %v407 = vpack.c.b16 %v311, %v307
    %v408 = vpack.c.b16 %v316, %v312
    %v409 = vpack.c.b16 %v317, %v313
    %v410 = vpack.c.b16 %v318, %v314
    %v411 = vpack.c.b16 %v319, %v315
    %v412 = vpack.c.b16 %v324, %v320
    %v413 = vpack.c.b16 %v325, %v321
    %v414 = vpack.c.b16 %v326, %v322
    %v415 = vpack.c.b16 %v327, %v323
    %v416 = vpack.c.b16 %v332, %v328
    %v417 = vpack.c.b16 %v333, %v329
    %v418 = vpack.c.b16 %v334, %v330
    %v419 = vpack.c.b16 %v335, %v331
    %v420 = vpack.c.b16 %v340, %v336
    %v421 = vpack.c.b16 %v341, %v337
    %v422 = vpack.c.b16 %v342, %v338
    %v423 = vpack.c.b16 %v343, %v339
    %v424 = vpack.c.b16 %v348, %v344
    %v425 = vpack.c.b16 %v349, %v345
    %v426 = vpack.c.b16 %v350, %v346
    %v427 = vpack.c.b16 %v351, %v347
    %v428 = vpack.c.b16 %v356, %v352
    %v429 = vpack.c.b16 %v357, %v353
    %v430 = vpack.c.b16 %v358, %v354
    %v431 = vpack.c.b16 %v359, %v355
    %v432 = vpack.c.b16 %v364, %v360
    %v433 = vpack.c.b16 %v365, %v361
    %v434 = vpack.c.b16 %v366, %v362
    %v435 = vpack.c.b16 %v367, %v363
    %v436 = vpack.c.b16 %v372, %v368
    %v437 = vpack.c.b16 %v373, %v369
    %v438 = vpack.c.b16 %v374, %v370
    %v439 = vpack.c.b16 %v375, %v371
    %504 = vmatprep.subr.bf16.mxu0 %v377
    %505 = vmatpush1.bf16.msra.mxu0 %v376
    %506 = vmatprep.subr.bf16.mxu0 %v381
    %507 = vmatpush1.bf16.msra.mxu0 %v380
    %508 = vmatprep.subr.bf16.mxu0 %v385
    %509 = vmatpush1.bf16.msra.mxu0 %v384
    %510 = vmatprep.subr.bf16.mxu0 %v389
    %511 = vmatpush1.bf16.msra.mxu0 %v388
    %512 = vmatprep.subr.bf16.mxu0 %v393
    %513 = vmatpush1.bf16.msra.mxu0 %v392
    %514 = vmatprep.subr.bf16.mxu0 %v397
    %515 = vmatpush1.bf16.msra.mxu0 %v396
    %516 = vmatprep.subr.bf16.mxu0 %v401
    %517 = vmatpush1.bf16.msra.mxu0 %v400
    %518 = vmatprep.subr.bf16.mxu0 %v405
    %519 = vmatpush1.bf16.msra.mxu0 %v404
    %520 = vmatprep.subr.bf16.mxu0 %v409
    %521 = vmatpush1.bf16.msra.mxu0 %v408
    %522 = vmatprep.subr.bf16.mxu0 %v413
    %523 = vmatpush1.bf16.msra.mxu0 %v412
    %524 = vmatprep.subr.bf16.mxu0 %v417
    %525 = vmatpush1.bf16.msra.mxu0 %v416
    %526 = vmatprep.subr.bf16.mxu0 %v421
    %527 = vmatpush1.bf16.msra.mxu0 %v420
    %528 = vmatprep.subr.bf16.mxu0 %v425
    %529 = vmatpush1.bf16.msra.mxu0 %v424
    %530 = vmatprep.subr.bf16.mxu0 %v429
    %531 = vmatpush1.bf16.msra.mxu0 %v428
    %532 = vmatprep.subr.bf16.mxu0 %v433
    %533 = vmatpush1.bf16.msra.mxu0 %v432
    %534 = vmatprep.subr.bf16.mxu0 %v437
    %535 = vmatpush1.bf16.msra.mxu0 %v436
    %536 = vmatprep.mubr.bf16.mxu0 %v97
    %537 = vmatmul.mubr.bf16.gmra.mrb[0].mxu0 %v96
    %v538 = vpop.f32.mrb[0].mxu0
    %v539 = vadd.f32 %v167, %v538
    %v540 = vpop.f32.mrb[0].mxu0
    %v541 = vadd.f32 %v171, %v540
    %v542 = vpop.f32.mrb[0].mxu0
    %v543 = vpop.f32.mrb[0].mxu0
    %544 = vdwg.mxu0
    %545 = vmatprep.subr.bf16.mxu0 %v379
    %546 = vmatpush1.bf16.msra.mxu0 %v378
    %547 = vmatprep.subr.bf16.mxu0 %v383
    %548 = vmatpush1.bf16.msra.mxu0 %v382
    %549 = vmatprep.subr.bf16.mxu0 %v387
    %550 = vmatpush1.bf16.msra.mxu0 %v386
    %551 = vmatprep.subr.bf16.mxu0 %v391
    %552 = vmatpush1.bf16.msra.mxu0 %v390
    %553 = vmatprep.subr.bf16.mxu0 %v395
    %554 = vmatpush1.bf16.msra.mxu0 %v394
    %555 = vmatprep.subr.bf16.mxu0 %v399
    %556 = vmatpush1.bf16.msra.mxu0 %v398
    %557 = vmatprep.subr.bf16.mxu0 %v403
    %558 = vmatpush1.bf16.msra.mxu0 %v402
    %559 = vmatprep.subr.bf16.mxu0 %v407
    %560 = vmatpush1.bf16.msra.mxu0 %v406
    %561 = vmatprep.subr.bf16.mxu0 %v411
    %562 = vmatpush1.bf16.msra.mxu0 %v410
    %563 = vmatprep.subr.bf16.mxu0 %v415
    %564 = vmatpush1.bf16.msra.mxu0 %v414
    %565 = vmatprep.subr.bf16.mxu0 %v419
    %566 = vmatpush1.bf16.msra.mxu0 %v418
    %567 = vmatprep.subr.bf16.mxu0 %v423
    %568 = vmatpush1.bf16.msra.mxu0 %v422
    %569 = vmatprep.subr.bf16.mxu0 %v427
    %570 = vmatpush1.bf16.msra.mxu0 %v426
    %571 = vmatprep.subr.bf16.mxu0 %v431
    %572 = vmatpush1.bf16.msra.mxu0 %v430
    %573 = vmatprep.subr.bf16.mxu0 %v435
    %574 = vmatpush1.bf16.msra.mxu0 %v434
    %575 = vmatprep.subr.bf16.mxu0 %v439
    %576 = vmatpush1.bf16.msra.mxu0 %v438
    %577 = vmatprep.mubr.bf16.mxu0 %v97
    %578 = vmatmul.mubr.bf16.gmra.mrb[0].mxu0 %v96
    %v579 = vpop.f32.mrb[0].mxu0
    %v580 = vadd.f32 %v175, %v579
    %v581 = vpop.f32.mrb[0].mxu0
    %v582 = vadd.f32 %v179, %v581
    %v583 = vpop.f32.mrb[0].mxu0
    %v584 = vpop.f32.mrb[0].mxu0
    %585 = vdwg.mxu0
    %v586 = vld [vmem:[#allocation8] sm:$0xff]
    %v587 = vxor.u32 %v539, 2147483648
    %v588 = vxor.u32 %v541, 2147483648
    %v589 = vmul.f32 %v587, 1.442695
    %v590 = vpow.pop %v589
    %v591 = vmul.f32 %v588, 1.442695
    %v592 = vpow.pop %v591
    %v593 = vadd.f32 %v590, 1.0
    %v594 = vadd.f32 %v592, 1.0
    %v595 = vrcp.pop %v593
    %v596 = vmul.f32 1.0, %v595
    %v597 = vrcp.pop %v594
    %v598 = vmul.f32 1.0, %v597
    %v599 = vtanh.pop %v580
    %v600 = vxor.u32 %v582, 2147483648
    %v601 = vmul.f32 %v600, 1.442695
    %v602 = vpow.pop %v601
    %v603 = vadd.f32 %v602, 1.0
    %v604 = vrcp.pop %v603
    %v605 = vmul.f32 1.0, %v604
    %v606 = vmul.f32 %v598, %v586
    %v607 = vmul.f32 %v596, %v599
    %v608 = vadd.f32 %v606, %v607
    %v609 = vtanh.pop %v608
    %v610 = vmul.f32 %v605, %v609
    %611 = vst [vmem:[#allocation12] sm:$0xff] %v610
    %612 = vst [vmem:[#allocation13] sm:$0xff] %v608
    %613 = vst [vmem:[#allocation2] sm:$0xff] %v610
    %s614 = scalar_lea.vmem [#allocation6], 8
    %v615 = vld [vmem:[%s614] sm:$0xff]
    %616 = vst [vmem:[#allocation2 + $0x8] sm:$0xff] %v615
    %v617 = vld [vmem:[#allocation2] sm:$0xff]
    %v618 = vld [vmem:[#allocation2 + $0x8] sm:$0xff]
    %v619 = vpack.c.bf16 %v617, %v617
    %v620 = vpack.c.bf16 %v618, %v618
    %s621 = scalar_lea.vmem [#allocation9], 512
    %v622 = vld [vmem:[%s621] sm:$0xff]
    %v623 = vld [vmem:[%s621 + $0x8] sm:$0xff]
    %v624 = vld [vmem:[%s621 + $0x10] sm:$0xff]
    %v625 = vld [vmem:[%s621 + $0x18] sm:$0xff]
    %v626 = vld [vmem:[%s621 + $0x20] sm:$0xff]
    %v627 = vld [vmem:[%s621 + $0x28] sm:$0xff]
    %v628 = vld [vmem:[%s621 + $0x30] sm:$0xff]
    %v629 = vld [vmem:[%s621 + $0x38] sm:$0xff]
    %v630 = vld [vmem:[%s621 + $0x40] sm:$0xff]
    %v631 = vld [vmem:[%s621 + $0x48] sm:$0xff]
    %v632 = vld [vmem:[%s621 + $0x50] sm:$0xff]
    %v633 = vld [vmem:[%s621 + $0x58] sm:$0xff]
    %v634 = vld [vmem:[%s621 + $0x60] sm:$0xff]
    %v635 = vld [vmem:[%s621 + $0x68] sm:$0xff]
    %v636 = vld [vmem:[%s621 + $0x70] sm:$0xff]
    %v637 = vld [vmem:[%s621 + $0x78] sm:$0xff]
    %v638 = vld [vmem:[%s621 + $0x80] sm:$0xff]
    %v639 = vld [vmem:[%s621 + $0x88] sm:$0xff]
    %v640 = vld [vmem:[%s621 + $0x90] sm:$0xff]
    %v641 = vld [vmem:[%s621 + $0x98] sm:$0xff]
    %v642 = vld [vmem:[%s621 + $0xa0] sm:$0xff]
    %v643 = vld [vmem:[%s621 + $0xa8] sm:$0xff]
    %v644 = vld [vmem:[%s621 + $0xb0] sm:$0xff]
    %v645 = vld [vmem:[%s621 + $0xb8] sm:$0xff]
    %v646 = vld [vmem:[%s621 + $0xc0] sm:$0xff]
    %v647 = vld [vmem:[%s621 + $0xc8] sm:$0xff]
    %v648 = vld [vmem:[%s621 + $0xd0] sm:$0xff]
    %v649 = vld [vmem:[%s621 + $0xd8] sm:$0xff]
    %v650 = vld [vmem:[%s621 + $0xe0] sm:$0xff]
    %v651 = vld [vmem:[%s621 + $0xe8] sm:$0xff]
    %v652 = vld [vmem:[%s621 + $0xf0] sm:$0xff]
    %v653 = vld [vmem:[%s621 + $0xf8] sm:$0xff]
    %v654 = vld [vmem:[%s621 + $0x100] sm:$0xff]
    %v655 = vld [vmem:[%s621 + $0x108] sm:$0xff]
    %v656 = vld [vmem:[%s621 + $0x110] sm:$0xff]
    %v657 = vld [vmem:[%s621 + $0x118] sm:$0xff]
    %v658 = vld [vmem:[%s621 + $0x120] sm:$0xff]
    %v659 = vld [vmem:[%s621 + $0x128] sm:$0xff]
    %v660 = vld [vmem:[%s621 + $0x130] sm:$0xff]
    %v661 = vld [vmem:[%s621 + $0x138] sm:$0xff]
    %v662 = vld [vmem:[%s621 + $0x140] sm:$0xff]
    %v663 = vld [vmem:[%s621 + $0x148] sm:$0xff]
    %v664 = vld [vmem:[%s621 + $0x150] sm:$0xff]
    %v665 = vld [vmem:[%s621 + $0x158] sm:$0xff]
    %v666 = vld [vmem:[%s621 + $0x160] sm:$0xff]
    %v667 = vld [vmem:[%s621 + $0x168] sm:$0xff]
    %v668 = vld [vmem:[%s621 + $0x170] sm:$0xff]
    %v669 = vld [vmem:[%s621 + $0x178] sm:$0xff]
    %v670 = vld [vmem:[%s621 + $0x180] sm:$0xff]
    %v671 = vld [vmem:[%s621 + $0x188] sm:$0xff]
    %v672 = vld [vmem:[%s621 + $0x190] sm:$0xff]
    %v673 = vld [vmem:[%s621 + $0x198] sm:$0xff]
    %v674 = vld [vmem:[%s621 + $0x1a0] sm:$0xff]
    %v675 = vld [vmem:[%s621 + $0x1a8] sm:$0xff]
    %v676 = vld [vmem:[%s621 + $0x1b0] sm:$0xff]
    %v677 = vld [vmem:[%s621 + $0x1b8] sm:$0xff]
    %v678 = vld [vmem:[%s621 + $0x1c0] sm:$0xff]
    %v679 = vld [vmem:[%s621 + $0x1c8] sm:$0xff]
    %v680 = vld [vmem:[%s621 + $0x1d0] sm:$0xff]
    %v681 = vld [vmem:[%s621 + $0x1d8] sm:$0xff]
    %v682 = vld [vmem:[%s621 + $0x1e0] sm:$0xff]
    %v683 = vld [vmem:[%s621 + $0x1e8] sm:$0xff]
    %v684 = vld [vmem:[%s621 + $0x1f0] sm:$0xff]
    %v685 = vld [vmem:[%s621 + $0x1f8] sm:$0xff]
    %s686 = scalar_lea.vmem [#allocation11], 4
    %v687 = vld [vmem:[%s686] sm:$0xf]
    %v689 = vlaneseq
    %v690 = vshrl.u32 %v689, 7
    %v691 = vsub.s32 0, %v690
    %v692 = vrot.slane %v687, %v691
    %v693 = vlaneseq
    %v694 = vshrl.u32 %v693, 7
    %v695 = vsub.s32 1, %v694
    %v696 = vrot.slane %v687, %v695
    %v697 = vlaneseq
    %v698 = vshrl.u32 %v697, 7
    %v699 = vsub.s32 2, %v698
    %v700 = vrot.slane %v687, %v699
    %v701 = vlaneseq
    %v702 = vshrl.u32 %v701, 7
    %v703 = vsub.s32 3, %v702
    %v704 = vrot.slane %v687, %v703
    %v773 = vunpack.c.l.b16 %v622
    %v774 = vunpack.c.h.b16 %v622
    %v775 = vunpack.c.l.b16 %v623
    %v776 = vunpack.c.h.b16 %v623
    %v777 = vunpack.c.l.b16 %v624
    %v778 = vunpack.c.h.b16 %v624
    %v779 = vunpack.c.l.b16 %v625
    %v780 = vunpack.c.h.b16 %v625
    %v781 = vunpack.c.l.b16 %v626
    %v782 = vunpack.c.h.b16 %v626
    %v783 = vunpack.c.l.b16 %v627
    %v784 = vunpack.c.h.b16 %v627
    %v785 = vunpack.c.l.b16 %v628
    %v786 = vunpack.c.h.b16 %v628
    %v787 = vunpack.c.l.b16 %v629
    %v788 = vunpack.c.h.b16 %v629
    %v789 = vunpack.c.l.b16 %v630
    %v790 = vunpack.c.h.b16 %v630
    %v791 = vunpack.c.l.b16 %v631
    %v792 = vunpack.c.h.b16 %v631
    %v793 = vunpack.c.l.b16 %v632
    %v794 = vunpack.c.h.b16 %v632
    %v795 = vunpack.c.l.b16 %v633
    %v796 = vunpack.c.h.b16 %v633
    %v797 = vunpack.c.l.b16 %v634
    %v798 = vunpack.c.h.b16 %v634
    %v799 = vunpack.c.l.b16 %v635
    %v800 = vunpack.c.h.b16 %v635
    %v801 = vunpack.c.l.b16 %v636
    %v802 = vunpack.c.h.b16 %v636
    %v803 = vunpack.c.l.b16 %v637
    %v804 = vunpack.c.h.b16 %v637
    %v805 = vunpack.c.l.b16 %v638
    %v806 = vunpack.c.h.b16 %v638
    %v807 = vunpack.c.l.b16 %v639
    %v808 = vunpack.c.h.b16 %v639
    %v809 = vunpack.c.l.b16 %v640
    %v810 = vunpack.c.h.b16 %v640
    %v811 = vunpack.c.l.b16 %v641
    %v812 = vunpack.c.h.b16 %v641
    %v813 = vunpack.c.l.b16 %v642
    %v814 = vunpack.c.h.b16 %v642
    %v815 = vunpack.c.l.b16 %v643
    %v816 = vunpack.c.h.b16 %v643
    %v817 = vunpack.c.l.b16 %v644
    %v818 = vunpack.c.h.b16 %v644
    %v819 = vunpack.c.l.b16 %v645
    %v820 = vunpack.c.h.b16 %v645
    %v821 = vunpack.c.l.b16 %v646
    %v822 = vunpack.c.h.b16 %v646
    %v823 = vunpack.c.l.b16 %v647
    %v824 = vunpack.c.h.b16 %v647
    %v825 = vunpack.c.l.b16 %v648
    %v826 = vunpack.c.h.b16 %v648
    %v827 = vunpack.c.l.b16 %v649
    %v828 = vunpack.c.h.b16 %v649
    %v829 = vunpack.c.l.b16 %v650
    %v830 = vunpack.c.h.b16 %v650
    %v831 = vunpack.c.l.b16 %v651
    %v832 = vunpack.c.h.b16 %v651
    %v833 = vunpack.c.l.b16 %v652
    %v834 = vunpack.c.h.b16 %v652
    %v835 = vunpack.c.l.b16 %v653
    %v836 = vunpack.c.h.b16 %v653
    %v837 = vunpack.c.l.b16 %v654
    %v838 = vunpack.c.h.b16 %v654
    %v839 = vunpack.c.l.b16 %v655
    %v840 = vunpack.c.h.b16 %v655
    %v841 = vunpack.c.l.b16 %v656
    %v842 = vunpack.c.h.b16 %v656
    %v843 = vunpack.c.l.b16 %v657
    %v844 = vunpack.c.h.b16 %v657
    %v845 = vunpack.c.l.b16 %v658
    %v846 = vunpack.c.h.b16 %v658
    %v847 = vunpack.c.l.b16 %v659
    %v848 = vunpack.c.h.b16 %v659
    %v849 = vunpack.c.l.b16 %v660
    %v850 = vunpack.c.h.b16 %v660
    %v851 = vunpack.c.l.b16 %v661
    %v852 = vunpack.c.h.b16 %v661
    %v853 = vunpack.c.l.b16 %v662
    %v854 = vunpack.c.h.b16 %v662
    %v855 = vunpack.c.l.b16 %v663
    %v856 = vunpack.c.h.b16 %v663
    %v857 = vunpack.c.l.b16 %v664
    %v858 = vunpack.c.h.b16 %v664
    %v859 = vunpack.c.l.b16 %v665
    %v860 = vunpack.c.h.b16 %v665
    %v861 = vunpack.c.l.b16 %v666
    %v862 = vunpack.c.h.b16 %v666
    %v863 = vunpack.c.l.b16 %v667
    %v864 = vunpack.c.h.b16 %v667
    %v865 = vunpack.c.l.b16 %v668
    %v866 = vunpack.c.h.b16 %v668
    %v867 = vunpack.c.l.b16 %v669
    %v868 = vunpack.c.h.b16 %v669
    %v869 = vunpack.c.l.b16 %v670
    %v870 = vunpack.c.h.b16 %v670
    %v871 = vunpack.c.l.b16 %v671
    %v872 = vunpack.c.h.b16 %v671
    %v873 = vunpack.c.l.b16 %v672
    %v874 = vunpack.c.h.b16 %v672
    %v875 = vunpack.c.l.b16 %v673
    %v876 = vunpack.c.h.b16 %v673
    %v877 = vunpack.c.l.b16 %v674
    %v878 = vunpack.c.h.b16 %v674
    %v879 = vunpack.c.l.b16 %v675
    %v880 = vunpack.c.h.b16 %v675
    %v881 = vunpack.c.l.b16 %v676
    %v882 = vunpack.c.h.b16 %v676
    %v883 = vunpack.c.l.b16 %v677
    %v884 = vunpack.c.h.b16 %v677
    %v885 = vunpack.c.l.b16 %v678
    %v886 = vunpack.c.h.b16 %v678
    %v887 = vunpack.c.l.b16 %v679
    %v888 = vunpack.c.h.b16 %v679
    %v889 = vunpack.c.l.b16 %v680
    %v890 = vunpack.c.h.b16 %v680
    %v891 = vunpack.c.l.b16 %v681
    %v892 = vunpack.c.h.b16 %v681
    %v893 = vunpack.c.l.b16 %v682
    %v894 = vunpack.c.h.b16 %v682
    %v895 = vunpack.c.l.b16 %v683
    %v896 = vunpack.c.h.b16 %v683
    %v897 = vunpack.c.l.b16 %v684
    %v898 = vunpack.c.h.b16 %v684
    %v899 = vunpack.c.l.b16 %v685
    %v900 = vunpack.c.h.b16 %v685
    %v901 = vpack.c.b16 %v777, %v773
    %v902 = vpack.c.b16 %v778, %v774
    %v903 = vpack.c.b16 %v779, %v775
    %v904 = vpack.c.b16 %v780, %v776
    %v905 = vpack.c.b16 %v785, %v781
    %v906 = vpack.c.b16 %v786, %v782
    %v907 = vpack.c.b16 %v787, %v783
    %v908 = vpack.c.b16 %v788, %v784
    %v909 = vpack.c.b16 %v793, %v789
    %v910 = vpack.c.b16 %v794, %v790
    %v911 = vpack.c.b16 %v795, %v791
    %v912 = vpack.c.b16 %v796, %v792
    %v913 = vpack.c.b16 %v801, %v797
    %v914 = vpack.c.b16 %v802, %v798
    %v915 = vpack.c.b16 %v803, %v799
    %v916 = vpack.c.b16 %v804, %v800
    %v917 = vpack.c.b16 %v809, %v805
    %v918 = vpack.c.b16 %v810, %v806
    %v919 = vpack.c.b16 %v811, %v807
    %v920 = vpack.c.b16 %v812, %v808
    %v921 = vpack.c.b16 %v817, %v813
    %v922 = vpack.c.b16 %v818, %v814
    %v923 = vpack.c.b16 %v819, %v815
    %v924 = vpack.c.b16 %v820, %v816
    %v925 = vpack.c.b16 %v825, %v821
    %v926 = vpack.c.b16 %v826, %v822
    %v927 = vpack.c.b16 %v827, %v823
    %v928 = vpack.c.b16 %v828, %v824
    %v929 = vpack.c.b16 %v833, %v829
    %v930 = vpack.c.b16 %v834, %v830
    %v931 = vpack.c.b16 %v835, %v831
    %v932 = vpack.c.b16 %v836, %v832
    %v933 = vpack.c.b16 %v841, %v837
    %v934 = vpack.c.b16 %v842, %v838
    %v935 = vpack.c.b16 %v843, %v839
    %v936 = vpack.c.b16 %v844, %v840
    %v937 = vpack.c.b16 %v849, %v845
    %v938 = vpack.c.b16 %v850, %v846
    %v939 = vpack.c.b16 %v851, %v847
    %v940 = vpack.c.b16 %v852, %v848
    %v941 = vpack.c.b16 %v857, %v853
    %v942 = vpack.c.b16 %v858, %v854
    %v943 = vpack.c.b16 %v859, %v855
    %v944 = vpack.c.b16 %v860, %v856
    %v945 = vpack.c.b16 %v865, %v861
    %v946 = vpack.c.b16 %v866, %v862
    %v947 = vpack.c.b16 %v867, %v863
    %v948 = vpack.c.b16 %v868, %v864
    %v949 = vpack.c.b16 %v873, %v869
    %v950 = vpack.c.b16 %v874, %v870
    %v951 = vpack.c.b16 %v875, %v871
    %v952 = vpack.c.b16 %v876, %v872
    %v953 = vpack.c.b16 %v881, %v877
    %v954 = vpack.c.b16 %v882, %v878
    %v955 = vpack.c.b16 %v883, %v879
    %v956 = vpack.c.b16 %v884, %v880
    %v957 = vpack.c.b16 %v889, %v885
    %v958 = vpack.c.b16 %v890, %v886
    %v959 = vpack.c.b16 %v891, %v887
    %v960 = vpack.c.b16 %v892, %v888
    %v961 = vpack.c.b16 %v897, %v893
    %v962 = vpack.c.b16 %v898, %v894
    %v963 = vpack.c.b16 %v899, %v895
    %v964 = vpack.c.b16 %v900, %v896
    %1029 = vmatprep.subr.bf16.mxu0 %v902
    %1030 = vmatpush1.bf16.msra.mxu0 %v901
    %1031 = vmatprep.subr.bf16.mxu0 %v906
    %1032 = vmatpush1.bf16.msra.mxu0 %v905
    %1033 = vmatprep.subr.bf16.mxu0 %v910
    %1034 = vmatpush1.bf16.msra.mxu0 %v909
    %1035 = vmatprep.subr.bf16.mxu0 %v914
    %1036 = vmatpush1.bf16.msra.mxu0 %v913
    %1037 = vmatprep.subr.bf16.mxu0 %v918
    %1038 = vmatpush1.bf16.msra.mxu0 %v917
    %1039 = vmatprep.subr.bf16.mxu0 %v922
    %1040 = vmatpush1.bf16.msra.mxu0 %v921
    %1041 = vmatprep.subr.bf16.mxu0 %v926
    %1042 = vmatpush1.bf16.msra.mxu0 %v925
    %1043 = vmatprep.subr.bf16.mxu0 %v930
    %1044 = vmatpush1.bf16.msra.mxu0 %v929
    %1045 = vmatprep.subr.bf16.mxu0 %v934
    %1046 = vmatpush1.bf16.msra.mxu0 %v933
    %1047 = vmatprep.subr.bf16.mxu0 %v938
    %1048 = vmatpush1.bf16.msra.mxu0 %v937
    %1049 = vmatprep.subr.bf16.mxu0 %v942
    %1050 = vmatpush1.bf16.msra.mxu0 %v941
    %1051 = vmatprep.subr.bf16.mxu0 %v946
    %1052 = vmatpush1.bf16.msra.mxu0 %v945
    %1053 = vmatprep.subr.bf16.mxu0 %v950
    %1054 = vmatpush1.bf16.msra.mxu0 %v949
    %1055 = vmatprep.subr.bf16.mxu0 %v954
    %1056 = vmatpush1.bf16.msra.mxu0 %v953
    %1057 = vmatprep.subr.bf16.mxu0 %v958
    %1058 = vmatpush1.bf16.msra.mxu0 %v957
    %1059 = vmatprep.subr.bf16.mxu0 %v962
    %1060 = vmatpush1.bf16.msra.mxu0 %v961
    %1061 = vmatprep.mubr.bf16.mxu0 %v620
    %1062 = vmatmul.mubr.bf16.gmra.mrb[0].mxu0 %v619
    %v1063 = vpop.f32.mrb[0].mxu0
    %v1064 = vadd.f32 %v692, %v1063
    %v1065 = vpop.f32.mrb[0].mxu0
    %v1066 = vadd.f32 %v696, %v1065
    %v1067 = vpop.f32.mrb[0].mxu0
    %v1068 = vpop.f32.mrb[0].mxu0
    %1069 = vdwg.mxu0
    %1070 = vmatprep.subr.bf16.mxu0 %v904
    %1071 = vmatpush1.bf16.msra.mxu0 %v903
    %1072 = vmatprep.subr.bf16.mxu0 %v908
    %1073 = vmatpush1.bf16.msra.mxu0 %v907
    %1074 = vmatprep.subr.bf16.mxu0 %v912
    %1075 = vmatpush1.bf16.msra.mxu0 %v911
    %1076 = vmatprep.subr.bf16.mxu0 %v916
    %1077 = vmatpush1.bf16.msra.mxu0 %v915
    %1078 = vmatprep.subr.bf16.mxu0 %v920
    %1079 = vmatpush1.bf16.msra.mxu0 %v919
    %1080 = vmatprep.subr.bf16.mxu0 %v924
    %1081 = vmatpush1.bf16.msra.mxu0 %v923
    %1082 = vmatprep.subr.bf16.mxu0 %v928
    %1083 = vmatpush1.bf16.msra.mxu0 %v927
    %1084 = vmatprep.subr.bf16.mxu0 %v932
    %1085 = vmatpush1.bf16.msra.mxu0 %v931
    %1086 = vmatprep.subr.bf16.mxu0 %v936
    %1087 = vmatpush1.bf16.msra.mxu0 %v935
    %1088 = vmatprep.subr.bf16.mxu0 %v940
    %1089 = vmatpush1.bf16.msra.mxu0 %v939
    %1090 = vmatprep.subr.bf16.mxu0 %v944
    %1091 = vmatpush1.bf16.msra.mxu0 %v943
    %1092 = vmatprep.subr.bf16.mxu0 %v948
    %1093 = vmatpush1.bf16.msra.mxu0 %v947
    %1094 = vmatprep.subr.bf16.mxu0 %v952
    %1095 = vmatpush1.bf16.msra.mxu0 %v951
    %1096 = vmatprep.subr.bf16.mxu0 %v956
    %1097 = vmatpush1.bf16.msra.mxu0 %v955
    %1098 = vmatprep.subr.bf16.mxu0 %v960
    %1099 = vmatpush1.bf16.msra.mxu0 %v959
    %1100 = vmatprep.subr.bf16.mxu0 %v964
    %1101 = vmatpush1.bf16.msra.mxu0 %v963
    %1102 = vmatprep.mubr.bf16.mxu0 %v620
    %1103 = vmatmul.mubr.bf16.gmra.mrb[0].mxu0 %v619
    %v1104 = vpop.f32.mrb[0].mxu0
    %v1105 = vadd.f32 %v700, %v1104
    %v1106 = vpop.f32.mrb[0].mxu0
    %v1107 = vadd.f32 %v704, %v1106
    %v1108 = vpop.f32.mrb[0].mxu0
    %v1109 = vpop.f32.mrb[0].mxu0
    %1110 = vdwg.mxu0
    %s1111 = scalar_lea.vmem [#allocation8], 8
    %v1112 = vld [vmem:[%s1111] sm:$0xff]
    %v1113 = vxor.u32 %v1064, 2147483648
    %v1114 = vxor.u32 %v1066, 2147483648
    %v1115 = vmul.f32 %v1113, 1.442695
    %v1116 = vpow.pop %v1115
    %v1117 = vmul.f32 %v1114, 1.442695
    %v1118 = vpow.pop %v1117
    %v1119 = vadd.f32 %v1116, 1.0
    %v1120 = vadd.f32 %v1118, 1.0
    %v1121 = vrcp.pop %v1119
    %v1122 = vmul.f32 1.0, %v1121
    %v1123 = vrcp.pop %v1120
    %v1124 = vmul.f32 1.0, %v1123
    %v1125 = vtanh.pop %v1105
    %v1126 = vxor.u32 %v1107, 2147483648
    %v1127 = vmul.f32 %v1126, 1.442695
    %v1128 = vpow.pop %v1127
    %v1129 = vadd.f32 %v1128, 1.0
    %v1130 = vrcp.pop %v1129
    %v1131 = vmul.f32 1.0, %v1130
    %v1132 = vmul.f32 %v1124, %v1112
    %v1133 = vmul.f32 %v1122, %v1125
    %v1134 = vadd.f32 %v1132, %v1133
    %v1135 = vtanh.pop %v1134
    %v1136 = vmul.f32 %v1131, %v1135
    %s1137 = scalar_lea.vmem [#allocation12], 8
    %1138 = vst [vmem:[%s1137] sm:$0xff] %v1136
    %s1139 = scalar_lea.vmem [#allocation13], 8
    %1140 = vst [vmem:[%s1139] sm:$0xff] %v1134
    // Predicated region
    $region42: #{tpu_custom_call.1} parent=1 // pred_check
      _
    $region43: #{tpu_custom_call.1} parent=1 // pred_check_branch
      %1142 = sbr.rel (0) target = $region45
    $region44: #{tpu_custom_call.1} parent=1 // pred_region
      %s1144 = ssub.s32 256, 256
      %1145 = vsyncadd [#allocation5], %s1144
      %s1146 = sshll.u32 [#allocation12], 4
      %s1147 = int_to_ptr.vmem [resolvable:$true] %s1146
      %1152 = dma.vmem_to_hbm [thread:$0]  %s1147, 256, %s5, [#allocation5], 128, 128, 8
    $region45: #{tpu_custom_call.1} parent=1 // pred_fallthru
      _
    // Predicated region
    $region46: #{tpu_custom_call.1} parent=1 // pred_check
      _
    $region47: #{tpu_custom_call.1} parent=1 // pred_check_branch
      %1154 = sbr.rel (0) target = $region49
    $region48: #{tpu_custom_call.1} parent=1 // pred_region
      %s1156 = ssub.s32 256, 256
      %1157 = vsyncadd [#allocation14], %s1156
      %s1158 = sshll.u32 [#allocation13], 4
      %s1159 = int_to_ptr.vmem [resolvable:$true] %s1158
      %1164 = dma.vmem_to_hbm [thread:$0]  %s1159, 256, %s6, [#allocation14], 128, 128, 8
    $region49: #{tpu_custom_call.1} parent=1 // pred_fallthru
      _
    // Predicated region
    $region50: #{tpu_custom_call.1} parent=1 // pred_check
      _
    $region51: #{tpu_custom_call.1} parent=1 // pred_check_branch
      %1166 = sbr.rel (0) target = $region53
    $region52: #{tpu_custom_call.1} parent=1 // pred_region
      %1167 = dma.done [#allocation5], 256
    $region53: #{tpu_custom_call.1} parent=1 // pred_fallthru
      _
    // Predicated region
    $region54: #{tpu_custom_call.1} parent=1 // pred_check
      _
    $region55: #{tpu_custom_call.1} parent=1 // pred_check_branch
      %1169 = sbr.rel (0) target = $region57
    $region56: #{tpu_custom_call.1} parent=1 // pred_region
      %1170 = dma.done [#allocation14], 256
    $region57: #{tpu_custom_call.1} parent=1 // pred_fallthru
      _
    %1171 = vsyncpa [#allocation4], 1
    %1172 = vsyncpa [#allocation7], 1
    %1173 = vsyncpa [#allocation10], 1
    %1174 = vsyncpa [#allocation5], 1
    %1175 = vsyncpa [#allocation14], 1

</llo_original>
